<compile_context>
chip_gen: v6e
topology: v6e:2x2x1
jax: 0.10.0
libtpu: 0.0.40
codegen_flags: <defaults>
</compile_context>

<pallas_src>
import functools

import jax
import jax.numpy as jnp
from jax.experimental import pallas as pl
from jax.experimental.pallas import tpu as pltpu

LANE = 128

# Per-generation defaults: row tile tm, d_ff slab tf, physical VMEM, and
# whether the VPU/EUP are bf16-capable (so SiLU gating can run in bf16).
_GEN_TABLE = {
    "v5e": dict(tm=256, tf=512, vmem=128 << 20, bf16_gate=False),
    "v6e": dict(tm=1024, tf=512, vmem=128 << 20, bf16_gate=True),
    "v7x": dict(tm=512, tf=256, vmem=64 << 20, bf16_gate=True),
    "unknown": dict(tm=256, tf=256, vmem=64 << 20, bf16_gate=False),
}


def _round_up(x, m):
    return ((x + m - 1) // m) * m


def _chip_generation():
    try:
        kind = jax.devices()[0].device_kind.lower()
    except Exception:
        return "unknown"
    for tag, gen in (("v7", "v7x"), ("v6", "v6e"), ("v5", "v5e")):
        if tag in kind:
            return gen
    return "unknown"


def _sublane_pack(dtype):
    # Native sublane pack: 8 rows of 32-bit, 16 of bf16, 32 of 1-byte types.
    return max(8, 32 // jnp.dtype(dtype).itemsize)


def _vmem_needed(tm, tf, d_model_p, w_item, o_item, g_item, buffering):
    x_tile = 2 * tm * d_model_p * w_item                 # double-buffered input
    wgu_tile = buffering * d_model_p * (2 * tf) * w_item  # fused gate|up slab
    wo_tile = buffering * tf * d_model_p * w_item          # down-proj slab
    out_tile = 2 * tm * d_model_p * o_item                 # double-buffered output
    acc = tm * d_model_p * 4                               # f32 accumulator scratch
    gu = tm * (2 * tf) * (g_item + 4)                      # matmul result (+ staging)
    hidden = tm * tf * (g_item + w_item)                   # gated product (+ cast)
    return x_tile + wgu_tile + wo_tile + out_tile + acc + gu + hidden


def _gated_mlp_kernel(x_ref, wgu_ref, wo_ref, o_ref, acc_ref, *, tf, gate_dtype):
    # x_ref  : [tm, d_model_p]
    # wgu_ref: [d_model_p, 2*tf]   columns [0:tf]=W_gate tile, [tf:2tf]=W_up tile
    # wo_ref : [tf, d_model_p]
    # o_ref  : [tm, d_model_p]
    # acc_ref: [tm, d_model_p] f32 accumulator (persists across the k axis)
    k = pl.program_id(1)

    @pl.when(k == 0)
    def _init():
        acc_ref[...] = jnp.zeros_like(acc_ref)

    # One fused MXU matmul for the gate+up projections of this d_ff slab.
    # MXU accumulates in f32 internally; gate_dtype controls the VPU/EUP
    # gating precision (bf16 on v6e/v7x, f32 on v5e or with f32 weights).
    gu = jnp.dot(x_ref[...], wgu_ref[...], preferred_element_type=gate_dtype)
    gate = gu[:, :tf]
    up = gu[:, tf:]
    hidden = (gate * jax.nn.sigmoid(gate)) * up
    # Down-projection of this slab, accumulated in f32.
    acc_ref[...] += jnp.dot(hidden.astype(wo_ref.dtype), wo_ref[...],
                            preferred_element_type=jnp.float32)

    @pl.when(k == pl.num_programs(1) - 1)
    def _finalize():
        o_ref[...] = acc_ref[...].astype(o_ref.dtype)


def prepare_gated_mlp_weights(w_gate, w_up, w_out, *, tf=None, dtype=jnp.bfloat16):
    """One-time weight preparation (call OUTSIDE the hot path).

    Transposes to [in, out] layout, pads feature dims to lane multiples,
    casts to the compute dtype (bf16 by default; pass float32 only for
    correctness checks), and fuses W_gate/W_up at d_ff-tile granularity so the
    kernel issues a single wide matmul per step.
    """
    d_ff, d_model = w_gate.shape
    assert w_up.shape == (d_ff, d_model)
    assert w_out.shape == (d_model, d_ff)

    gen = _chip_generation()
    if tf is None:
        tf = _GEN_TABLE[gen]["tf"]
        if jnp.dtype(dtype).itemsize >= 4:
            # f32 slabs double weight streaming & VMEM; keep them small so the
            # correctness path also fits v7x's 64 MiB per-TC VMEM.
            tf = min(tf, 256)
    assert tf % LANE == 0

    d_model_p = _round_up(d_model, LANE)
    tf_eff = min(tf, _round_up(d_ff, LANE))
    d_ff_p = _round_up(d_ff, tf_eff)
    nk = d_ff_p // tf_eff

    def pad_to(a, shape):
        return jnp.pad(a, [(0, s - d) for d, s in zip(a.shape, shape)])

    wg_t = pad_to(w_gate.T.astype(dtype), (d_model_p, d_ff_p))
    wu_t = pad_to(w_up.T.astype(dtype), (d_model_p, d_ff_p))
    wo_t = pad_to(w_out.T.astype(dtype), (d_ff_p, d_model_p))

    # Fuse gate & up: column block k of `wgu` is [gate_k | up_k], each tf wide.
    wgu = jnp.concatenate(
        [wg_t.reshape(d_model_p, nk, tf_eff),
         wu_t.reshape(d_model_p, nk, tf_eff)],
        axis=2,
    ).reshape(d_model_p, 2 * d_ff_p)

    return {
        "wgu": wgu, "wo": wo_t,
        "d_model": d_model, "d_model_p": d_model_p,
        "d_ff_p": d_ff_p, "tf": tf_eff,
    }


def gated_mlp(x, params, *, tm=None, out_dtype=None, weight_buffering=2):
    """x: [tokens, d_model]; params from prepare_gated_mlp_weights."""
    tokens, d_model = x.shape
    assert d_model == params["d_model"]
    wgu, wo = params["wgu"], params["wo"]
    d_model_p, d_ff_p, tf = params["d_model_p"], params["d_ff_p"], params["tf"]

    gen = _chip_generation()
    cfg = _GEN_TABLE[gen]
    compute_dtype = wgu.dtype
    if out_dtype is None:
        out_dtype = compute_dtype  # lane-dense, compute-dtype output by default
    gate_dtype = (jnp.bfloat16
                  if (cfg["bf16_gate"] and compute_dtype == jnp.bfloat16)
                  else jnp.float32)

    # Row tile: per-generation default, rounded to the dtype's sublane pack,
    # and clamped for small / ragged token counts.
    pack = _sublane_pack(compute_dtype)
    if tm is None:
        tm = cfg["tm"]
    tm = max(pack, _round_up(tm, pack))
    tm_eff = min(tm, _round_up(tokens, pack))

    # Size the scoped VMEM limit from the actual tiles + body temporaries and
    # clamp to this generation's physical VMEM; shrink tm if it would not fit
    # (guards e.g. the f32-weight configuration on v7x's 64 MiB).
    w_item = jnp.dtype(compute_dtype).itemsize
    o_item = jnp.dtype(out_dtype).itemsize
    g_item = jnp.dtype(gate_dtype).itemsize
    margin = 4 << 20
    cap = cfg["vmem"] - (2 << 20)
    needed = _vmem_needed(tm_eff, tf, d_model_p, w_item, o_item, g_item,
                          weight_buffering) + margin
    while needed > cap and tm_eff > pack:
        tm_eff = max(pack, (tm_eff // 2) // pack * pack)
        needed = _vmem_needed(tm_eff, tf, d_model_p, w_item, o_item, g_item,
                              weight_buffering) + margin
    vmem_limit = int(min(max(needed, 32 << 20), cap))

    tokens_p = _round_up(tokens, tm_eff)
    x_p = jnp.pad(x, ((0, tokens_p - tokens), (0, d_model_p - d_model)))
    x_p = x_p.astype(compute_dtype)

    grid = (tokens_p // tm_eff, d_ff_p // tf)

    def _wspec(shape, index_map):
        # Deeper weight-stream pipelining (Buffered(3)) is a v5e/v6e knob for
        # hiding exposed DMA; the default (2) keeps v7x inside 64 MiB.
        if weight_buffering == 2:
            return pl.BlockSpec(shape, index_map)
        return pl.BlockSpec(shape, index_map,
                            pipeline_mode=pl.Buffered(weight_buffering))

    out_p = pl.pallas_call(
        functools.partial(_gated_mlp_kernel, tf=tf, gate_dtype=gate_dtype),
        out_shape=jax.ShapeDtypeStruct((tokens_p, d_model_p), out_dtype),
        grid_spec=pltpu.PrefetchScalarGridSpec(
            num_scalar_prefetch=0,
            grid=grid,
            in_specs=[
                pl.BlockSpec((tm_eff, d_model_p), lambda i, k: (i, 0)),
                _wspec((d_model_p, 2 * tf), lambda i, k: (0, k)),
                _wspec((tf, d_model_p), lambda i, k: (k, 0)),
            ],
            out_specs=pl.BlockSpec((tm_eff, d_model_p), lambda i, k: (i, 0)),
            scratch_shapes=[pltpu.VMEM((tm_eff, d_model_p), jnp.float32)],
        ),
        compiler_params=pltpu.CompilerParams(
            dimension_semantics=("parallel", "arbitrary"),
            vmem_limit_bytes=vmem_limit,
        ),
    )(x_p, wgu, wo)

    return out_p[:tokens, :d_model]


def gated_mlp_ref(x, w_gate, w_up, w_out):
    g = x @ w_gate.T
    gate = g * jax.nn.sigmoid(g)
    up = x @ w_up.T
    return (gate * up) @ w_out.T


if __name__ == "__main__":
    # Small shapes implied by the module: batch=2, seq=8, d_model=32, d_ff=64.
    batch, seq, d_model, d_ff = 2, 8, 32, 64

    key = jax.random.PRNGKey(0)
    k_x, k_g, k_u, k_o = jax.random.split(key, 4)

    x = jax.random.normal(k_x, (batch, seq, d_model), dtype=jnp.float32)
    # PyTorch Linear layout: [out_features, in_features].
    scale_in = 1.0 / jnp.sqrt(jnp.float32(d_model))
    scale_ff = 1.0 / jnp.sqrt(jnp.float32(d_ff))
    w_gate = jax.random.uniform(k_g, (d_ff, d_model), jnp.float32,
                                -scale_in, scale_in)
    w_up = jax.random.uniform(k_u, (d_ff, d_model), jnp.float32,
                              -scale_in, scale_in)
    w_out = jax.random.uniform(k_o, (d_model, d_ff), jnp.float32,
                               -scale_ff, scale_ff)

    ref = gated_mlp_ref(x, w_gate, w_up, w_out)
    x_tok = x.reshape(batch * seq, d_model)

    # Production path: bf16 weights/activations/output, bf16 gating on v6e/v7x,
    # f32 accumulation everywhere. Weights prepared once, reused across calls.
    params_bf16 = prepare_gated_mlp_weights(w_gate, w_up, w_out)
    out_bf16 = gated_mlp(x_tok, params_bf16)
    jax.block_until_ready(out_bf16)
    out_bf16 = out_bf16.astype(jnp.float32).reshape(batch, seq, d_model)
    err_bf16 = float(jnp.max(jnp.abs(out_bf16 - ref)))
    assert err_bf16 < 0.1, err_bf16

    # Correctness-only f32 path.
    params_f32 = prepare_gated_mlp_weights(w_gate, w_up, w_out,
                                           dtype=jnp.float32)
    out_f32 = gated_mlp(x_tok, params_f32).reshape(batch, seq, d_model)
    jax.block_until_ready(out_f32)
    err_f32 = float(jnp.max(jnp.abs(out_f32 - ref)))
    assert err_f32 < 1e-4, err_f32

    print("KERNEL_OK")
</pallas_src>

<mosaic_0001>
module attributes {stable_mosaic.version = 11 : i64} {
  func.func @_gated_mlp_kernel(%arg0: i32, %arg1: i32, %arg2: memref<16x128xbf16, #tpu.memory_space<vmem>>, %arg3: memref<128x256xbf16, #tpu.memory_space<vmem>>, %arg4: memref<128x128xbf16, #tpu.memory_space<vmem>>, %arg5: memref<16x128xbf16, #tpu.memory_space<vmem>>, %arg6: memref<16x128xf32, #tpu.memory_space<vmem>>) attributes {dimension_semantics = [#tpu.dimension_semantics<parallel>, #tpu.dimension_semantics<arbitrary>], iteration_bounds = array<i64: 1, 1>, scalar_prefetch = 0 : i64, scratch_operands = 1 : i64, tpu.core_type = #tpu.core_type<tc>, window_params = [{transform_indices = @transform_0, window_bounds = array<i64: 16, 128>}, {transform_indices = @transform_1, window_bounds = array<i64: 128, 256>}, {transform_indices = @transform_2, window_bounds = array<i64: 128, 128>}, {transform_indices = @transform_3, window_bounds = array<i64: 16, 128>}]} {
    %c0_i32 = arith.constant 0 : i32
    %0 = arith.cmpi eq, %arg1, %c0_i32 : i32
    %1 = arith.extui %0 : i1 to i32
    %c0_i32_0 = arith.constant 0 : i32
    %2 = arith.cmpi ne, %1, %c0_i32_0 : i32
    scf.if %2 {
      %cst_14 = arith.constant 0.000000e+00 : f32
      %24 = vector.broadcast %cst_14 : f32 to vector<16x128xf32>
      %c0_15 = arith.constant 0 : index
      %c0_16 = arith.constant 0 : index
      %25 = vector.load %arg6[%c0_15, %c0_16] : memref<16x128xf32, #tpu.memory_space<vmem>>, vector<16x128xf32>
      tpu.vector_store %arg6[%c0_15, %c0_16], %24 {strides = array<i32>} : memref<16x128xf32, #tpu.memory_space<vmem>>, vector<16x128xf32>,
    } else {
    }
    %c0 = arith.constant 0 : index
    %c0_1 = arith.constant 0 : index
    %3 = vector.load %arg2[%c0, %c0_1] : memref<16x128xbf16, #tpu.memory_space<vmem>>, vector<16x128xbf16>
    %c0_2 = arith.constant 0 : index
    %c0_3 = arith.constant 0 : index
    %4 = vector.load %arg3[%c0_2, %c0_3] : memref<128x256xbf16, #tpu.memory_space<vmem>>, vector<128x256xbf16>
    %cst = arith.constant dense<0.000000e+00> : vector<16x256xf32>
    %5 = tpu.matmul %3, %4, %cst {dimension_numbers = #tpu.dot_dimension_numbers<[1], [0], [0], [1], [0, 0, 1, 1], [], []>} : vector<16x128xbf16>, vector<128x256xbf16>, vector<16x256xf32> -> vector<16x256xf32>
    %6 = vector.extract_strided_slice %5 {offsets = [0, 0], sizes = [16, 128], strides = [1, 1]} : vector<16x256xf32> to vector<16x128xf32>
    %7 = vector.extract_strided_slice %5 {offsets = [0, 128], sizes = [16, 128], strides = [1, 1]} : vector<16x256xf32> to vector<16x128xf32>
    %8 = arith.negf %6 : vector<16x128xf32>
    %9 = math.exp %8 : vector<16x128xf32>
    %cst_4 = arith.constant 1.000000e+00 : f32
    %10 = vector.broadcast %cst_4 : f32 to vector<16x128xf32>
    %11 = arith.addf %10, %9 : vector<16x128xf32>
    %12 = arith.divf %10, %11 : vector<16x128xf32>
    %13 = arith.mulf %6, %12 : vector<16x128xf32>
    %14 = arith.mulf %13, %7 : vector<16x128xf32>
    %c0_5 = arith.constant 0 : index
    %c0_6 = arith.constant 0 : index
    %15 = vector.load %arg6[%c0_5, %c0_6] : memref<16x128xf32, #tpu.memory_space<vmem>>, vector<16x128xf32>
    %16 = arith.truncf %14 : vector<16x128xf32> to vector<16x128xbf16>
    %c0_7 = arith.constant 0 : index
    %c0_8 = arith.constant 0 : index
    %17 = vector.load %arg4[%c0_7, %c0_8] : memref<128x128xbf16, #tpu.memory_space<vmem>>, vector<128x128xbf16>
    %cst_9 = arith.constant dense<0.000000e+00> : vector<16x128xf32>
    %18 = tpu.matmul %16, %17, %cst_9 {dimension_numbers = #tpu.dot_dimension_numbers<[1], [0], [0], [1], [0, 0, 1, 1], [], []>} : vector<16x128xbf16>, vector<128x128xbf16>, vector<16x128xf32> -> vector<16x128xf32>
    %19 = arith.addf %15, %18 : vector<16x128xf32>
    %c0_10 = arith.constant 0 : index
    %c0_11 = arith.constant 0 : index
    %20 = vector.load %arg6[%c0_10, %c0_11] : memref<16x128xf32, #tpu.memory_space<vmem>>, vector<16x128xf32>
    tpu.vector_store %arg6[%c0_10, %c0_11], %19 {strides = array<i32>} : memref<16x128xf32, #tpu.memory_space<vmem>>, vector<16x128xf32>,
    %c0_i32_12 = arith.constant 0 : i32
    %21 = arith.cmpi eq, %arg1, %c0_i32_12 : i32
    %22 = arith.extui %21 : i1 to i32
    %c0_i32_13 = arith.constant 0 : i32
    %23 = arith.cmpi ne, %22, %c0_i32_13 : i32
    scf.if %23 {
      %c0_14 = arith.constant 0 : index
      %c0_15 = arith.constant 0 : index
      %24 = vector.load %arg6[%c0_14, %c0_15] : memref<16x128xf32, #tpu.memory_space<vmem>>, vector<16x128xf32>
      %25 = arith.truncf %24 : vector<16x128xf32> to vector<16x128xbf16>
      %c0_16 = arith.constant 0 : index
      %c0_17 = arith.constant 0 : index
      %26 = vector.load %arg5[%c0_16, %c0_17] : memref<16x128xbf16, #tpu.memory_space<vmem>>, vector<16x128xbf16>
      tpu.vector_store %arg5[%c0_16, %c0_17], %25 {strides = array<i32>} : memref<16x128xbf16, #tpu.memory_space<vmem>>, vector<16x128xbf16>,
    } else {
    }
    return
  }
  func.func @transform_0(%arg0: i32, %arg1: i32) -> (i32, i32) {
    %c0_i32 = arith.constant 0 : i32
    %c0_i32_0 = arith.constant 0 : i32
    return %arg0, %c0_i32 : i32, i32
  }
  func.func @transform_1(%arg0: i32, %arg1: i32) -> (i32, i32) {
    %c0_i32 = arith.constant 0 : i32
    %c0_i32_0 = arith.constant 0 : i32
    return %c0_i32, %arg1 : i32, i32
  }
  func.func @transform_2(%arg0: i32, %arg1: i32) -> (i32, i32) {
    %c0_i32 = arith.constant 0 : i32
    %c0_i32_0 = arith.constant 0 : i32
    return %arg1, %c0_i32 : i32, i32
  }
  func.func @transform_3(%arg0: i32, %arg1: i32) -> (i32, i32) {
    %c0_i32 = arith.constant 0 : i32
    %c0_i32_0 = arith.constant 0 : i32
    return %arg0, %c0_i32 : i32, i32
  }
}

</mosaic_0001>

<llo_original>
// kernel: tpu_custom_call.1
$region0: #{tpu_custom_call.1}
  #allocation0 [shape = 'u32[]', space=smem, size = 0x4, offset = 0x4, fixed_abs, tag = 'smem constant byte address 0x4 - core index']
  #allocation1 [shape = 'u32[144,128]{1,0:T(1,128)}', space=vmem, size = 0x12000, scoped, tag = 'internal scratch']
  #allocation2 [shape = 'f32[16,128]{1,0:T(8,128)}', space=vmem, size = 0x2000, scoped, tag = 'scratch operand']
  %s0 = inlined_call_operand.hbm [shape: bf16[16,128], index: 0, kind: input, shape index: {}]
  %s1 = inlined_call_operand.hbm [shape: bf16[128,256], index: 1, kind: input, shape index: {}]
  %s2 = inlined_call_operand.hbm [shape: bf16[128,128], index: 2, kind: input, shape index: {}]
  %s3 = inlined_call_operand.hbm [shape: bf16[16,128], index: 3, kind: output, shape index: {}]
  %s4 = sld [smem:[#allocation0]]
  $region42: #{tpu_custom_call.1} parent=0
    _
  %s6 = ssub.s32 1, %s4
  %s7 = scalar_select 0, %s6, %s4
  $region1: #{tpu_custom_call.1} parent=0
    #allocation3 [shape = 'u8[4096]{0}', space=vmem, size = 0x1000, scoped, tag = 'input window, operand 0, single buffered']
    #allocation4 [shape = 's32[1]{0}', space=sflag, size = 0x4, scoped, tag = 'scoped memory for tpu_custom_call.1']
    #allocation5 [shape = 's32[1]{0}', space=sflag, size = 0x4, scoped, tag = 'scoped memory for tpu_custom_call.1']
    #allocation6 [shape = 'u8[65536]{0}', space=vmem, size = 0x10000, scoped, tag = 'input window, operand 1, single buffered']
    #allocation7 [shape = 's32[1]{0}', space=sflag, size = 0x4, scoped, tag = 'scoped memory for tpu_custom_call.1']
    #allocation8 [shape = 'u8[32768]{0}', space=vmem, size = 0x8000, scoped, tag = 'input window, operand 2, single buffered']
    #allocation9 [shape = 'u8[4096]{0}', space=vmem, size = 0x1000, scoped, tag = 'output window, operand 0, single buffered']
    %8 = vsyncpa [#allocation4], 0
    %9 = vsyncpa [#allocation7], 0
    %10 = vsyncpa [#allocation5], 0
    // Predicated region
    $region2: #{tpu_custom_call.1} parent=1 // pred_check
      _
    $region3: #{tpu_custom_call.1} parent=1 // pred_check_branch
      %12 = sbr.rel (0) target = $region5
    $region4: #{tpu_custom_call.1} parent=1 // pred_region
      %s14 = ssub.s32 128, 128
      %15 = vsyncadd [#allocation4], %s14
      %s16 = sshll.u32 [#allocation3], 4
      %s17 = int_to_ptr.vmem [resolvable:$true] %s16
      %22 = dma.hbm_to_vmem [thread:$0]  %s0, 128, %s17, [#allocation4], 64, 64, 4
    $region5: #{tpu_custom_call.1} parent=1 // pred_fallthru
      _
    // Predicated region
    $region6: #{tpu_custom_call.1} parent=1 // pred_check
      _
    $region7: #{tpu_custom_call.1} parent=1 // pred_check_branch
      %24 = sbr.rel (0) target = $region9
    $region8: #{tpu_custom_call.1} parent=1 // pred_region
      %s26 = ssub.s32 2048, 2048
      %27 = vsyncadd [#allocation7], %s26
      %s28 = sshll.u32 [#allocation6], 4
      %s29 = int_to_ptr.vmem [resolvable:$true] %s28
      %34 = dma.hbm_to_vmem [thread:$0]  %s1, 2048, %s29, [#allocation7], 128, 128, 8
    $region9: #{tpu_custom_call.1} parent=1 // pred_fallthru
      _
    // Predicated region
    $region10: #{tpu_custom_call.1} parent=1 // pred_check
      _
    $region11: #{tpu_custom_call.1} parent=1 // pred_check_branch
      %36 = sbr.rel (0) target = $region13
    $region12: #{tpu_custom_call.1} parent=1 // pred_region
      %s38 = ssub.s32 1024, 1024
      %39 = vsyncadd [#allocation7], %s38
      %s40 = sshll.u32 [#allocation8], 4
      %s41 = int_to_ptr.vmem [resolvable:$true] %s40
      %46 = dma.hbm_to_vmem [thread:$0]  %s2, 1024, %s41, [#allocation7], 64, 64, 4
    $region13: #{tpu_custom_call.1} parent=1 // pred_fallthru
      _
    // Predicated region
    $region14: #{tpu_custom_call.1} parent=1 // pred_check
      _
    $region15: #{tpu_custom_call.1} parent=1 // pred_check_branch
      %48 = sbr.rel (0) target = $region17
    $region16: #{tpu_custom_call.1} parent=1 // pred_region
      %49 = dma.done [#allocation4], 128
    $region17: #{tpu_custom_call.1} parent=1 // pred_fallthru
      _
    // Predicated region
    $region18: #{tpu_custom_call.1} parent=1 // pred_check
      _
    $region19: #{tpu_custom_call.1} parent=1 // pred_check_branch
      %51 = sbr.rel (0) target = $region21
    $region20: #{tpu_custom_call.1} parent=1 // pred_region
      %52 = dma.done [#allocation7], 2048
    $region21: #{tpu_custom_call.1} parent=1 // pred_fallthru
      _
    // Predicated region
    $region22: #{tpu_custom_call.1} parent=1 // pred_check
      _
    $region23: #{tpu_custom_call.1} parent=1 // pred_check_branch
      %54 = sbr.rel (0) target = $region25
    $region24: #{tpu_custom_call.1} parent=1 // pred_region
      %55 = dma.done [#allocation7], 1024
    $region25: #{tpu_custom_call.1} parent=1 // pred_fallthru
      _
    %p57 = scmp.eq.s32.totalorder 0, 0
    // Predicated region
    $region26: #{tpu_custom_call.1} parent=1 // pred_check
      %p58 = pneg %p57
    $region27: #{tpu_custom_call.1} parent=1 // pred_check_branch
      %60 = sbr.rel (%p58) target = $region29
    $region28: #{tpu_custom_call.1} parent=1 // pred_region
      %61 = vst [vmem:[#allocation2] sm:$0xff] 0.0
      %62 = vst [vmem:[#allocation2 + $0x8] sm:$0xff] 0.0
    $region29: #{tpu_custom_call.1} parent=1 // pred_fallthru
      _
    %v63 = vld [vmem:[#allocation3] sm:$0xf]
    %v64 = vld [vmem:[#allocation3 + $0x4] sm:$0xf]
    %v65 = vld [vmem:[#allocation6] sm:$0xff]
    %v66 = vld [vmem:[#allocation6 + $0x8] sm:$0xff]
    %v67 = vld [vmem:[#allocation6 + $0x10] sm:$0xff]
    %v68 = vld [vmem:[#allocation6 + $0x18] sm:$0xff]
    %v69 = vld [vmem:[#allocation6 + $0x20] sm:$0xff]
    %v70 = vld [vmem:[#allocation6 + $0x28] sm:$0xff]
    %v71 = vld [vmem:[#allocation6 + $0x30] sm:$0xff]
    %v72 = vld [vmem:[#allocation6 + $0x38] sm:$0xff]
    %v73 = vld [vmem:[#allocation6 + $0x40] sm:$0xff]
    %v74 = vld [vmem:[#allocation6 + $0x48] sm:$0xff]
    %v75 = vld [vmem:[#allocation6 + $0x50] sm:$0xff]
    %v76 = vld [vmem:[#allocation6 + $0x58] sm:$0xff]
    %v77 = vld [vmem:[#allocation6 + $0x60] sm:$0xff]
    %v78 = vld [vmem:[#allocation6 + $0x68] sm:$0xff]
    %v79 = vld [vmem:[#allocation6 + $0x70] sm:$0xff]
    %v80 = vld [vmem:[#allocation6 + $0x78] sm:$0xff]
    %v83 = vunpack.c.l.b16 %v63
    %v84 = vunpack.c.l.b16 %v64
    %v85 = vpack.c.b16 %v84, %v83
    %v103 = vunpack.c.l.b16 %v65
    %v104 = vunpack.c.h.b16 %v65
    %v105 = vunpack.c.l.b16 %v66
    %v106 = vunpack.c.h.b16 %v66
    %v107 = vunpack.c.l.b16 %v67
    %v108 = vunpack.c.h.b16 %v67
    %v109 = vunpack.c.l.b16 %v68
    %v110 = vunpack.c.h.b16 %v68
    %v111 = vunpack.c.l.b16 %v69
    %v112 = vunpack.c.h.b16 %v69
    %v113 = vunpack.c.l.b16 %v70
    %v114 = vunpack.c.h.b16 %v70
    %v115 = vunpack.c.l.b16 %v71
    %v116 = vunpack.c.h.b16 %v71
    %v117 = vunpack.c.l.b16 %v72
    %v118 = vunpack.c.h.b16 %v72
    %v119 = vunpack.c.l.b16 %v73
    %v120 = vunpack.c.h.b16 %v73
    %v121 = vunpack.c.l.b16 %v74
    %v122 = vunpack.c.h.b16 %v74
    %v123 = vunpack.c.l.b16 %v75
    %v124 = vunpack.c.h.b16 %v75
    %v125 = vunpack.c.l.b16 %v76
    %v126 = vunpack.c.h.b16 %v76
    %v127 = vunpack.c.l.b16 %v77
    %v128 = vunpack.c.h.b16 %v77
    %v129 = vunpack.c.l.b16 %v78
    %v130 = vunpack.c.h.b16 %v78
    %v131 = vunpack.c.l.b16 %v79
    %v132 = vunpack.c.h.b16 %v79
    %v133 = vunpack.c.l.b16 %v80
    %v134 = vunpack.c.h.b16 %v80
    %v135 = vpack.c.b16 %v105, %v103
    %v136 = vpack.c.b16 %v106, %v104
    %v137 = vpack.c.b16 %v109, %v107
    %v138 = vpack.c.b16 %v110, %v108
    %v139 = vpack.c.b16 %v113, %v111
    %v140 = vpack.c.b16 %v114, %v112
    %v141 = vpack.c.b16 %v117, %v115
    %v142 = vpack.c.b16 %v118, %v116
    %v143 = vpack.c.b16 %v121, %v119
    %v144 = vpack.c.b16 %v122, %v120
    %v145 = vpack.c.b16 %v125, %v123
    %v146 = vpack.c.b16 %v126, %v124
    %v147 = vpack.c.b16 %v129, %v127
    %v148 = vpack.c.b16 %v130, %v128
    %v149 = vpack.c.b16 %v133, %v131
    %v150 = vpack.c.b16 %v134, %v132
    %167 = vmatprep.subr.bf16.mxu0 %v150
    %168 = vmatpush1.bf16.msra.mxu0 %v149
    %169 = vmatprep.subr.bf16.mxu0 %v148
    %170 = vmatpush1.bf16.msra.mxu0 %v147
    %171 = vmatprep.subr.bf16.mxu0 %v146
    %172 = vmatpush1.bf16.msra.mxu0 %v145
    %173 = vmatprep.subr.bf16.mxu0 %v144
    %174 = vmatpush1.bf16.msra.mxu0 %v143
    %175 = vmatprep.subr.bf16.mxu0 %v142
    %176 = vmatpush1.bf16.msra.mxu0 %v141
    %177 = vmatprep.subr.bf16.mxu0 %v140
    %178 = vmatpush1.bf16.msra.mxu0 %v139
    %179 = vmatprep.subr.bf16.mxu0 %v138
    %180 = vmatpush1.bf16.msra.mxu0 %v137
    %181 = vmatprep.subr.bf16.mxu0 %v136
    %182 = vmatpush1.bf16.msra.mxu0 %v135
    %183 = vmatprep.subr.bf16.mxu0 0
    %184 = vmatpush2.bf16.msra.mxu0 0
    %185 = vmatprep.subr.bf16.mxu0 0
    %186 = vmatpush2.bf16.msra.mxu0 0
    %187 = vmatprep.subr.bf16.mxu0 0
    %188 = vmatpush2.bf16.msra.mxu0 0
    %189 = vmatprep.subr.bf16.mxu0 0
    %190 = vmatpush2.bf16.msra.mxu0 0
    %191 = vmatprep.subr.bf16.mxu0 0
    %192 = vmatpush2.bf16.msra.mxu0 0
    %193 = vmatprep.subr.bf16.mxu0 0
    %194 = vmatpush2.bf16.msra.mxu0 0
    %195 = vmatprep.subr.bf16.mxu0 0
    %196 = vmatpush2.bf16.msra.mxu0 0
    %197 = vmatprep.subr.bf16.mxu0 0
    %198 = vmatpush2.bf16.msra.mxu0 0
    %199 = vmatprep.mubr.bf16.mxu0 0
    %200 = vmatmul.mubr.bf16.gmra.mxu0 %v85
    %v201 = vpop.f32.mrf.mxu0
    %v202 = vadd.f32 0.0, %v201
    %v203 = vpop.f32.mrf.mxu0
    %v204 = vadd.f32 0.0, %v203
    %v205 = vpop.f32.mrf.mxu0
    %v206 = vadd.f32 0.0, %v205
    %v207 = vpop.f32.mrf.mxu0
    %v208 = vadd.f32 0.0, %v207
    %209 = vdwg.mxu0
    %v210 = vxor.u32 %v202, 2147483648
    %v211 = vxor.u32 %v206, 2147483648
    %v212 = vmul.f32 %v210, 1.442695
    %v213 = vpow.pop %v212
    %v214 = vmul.f32 %v211, 1.442695
    %v215 = vpow.pop %v214
    %v216 = vadd.f32 %v213, 1.0
    %v217 = vadd.f32 %v215, 1.0
    %v218 = vrcp.pop %v216
    %v219 = vmul.f32 1.0, %v218
    %v220 = vrcp.pop %v217
    %v221 = vmul.f32 1.0, %v220
    %v222 = vmul.f32 %v202, %v219
    %v223 = vmul.f32 %v206, %v221
    %v224 = vmul.f32 %v222, %v204
    %v225 = vmul.f32 %v223, %v208
    %v226 = vld [vmem:[#allocation2] sm:$0xff]
    %v227 = vld [vmem:[#allocation2 + $0x8] sm:$0xff]
    %v228 = vpack.c.bf16 %v225, %v224
    %v229 = vld [vmem:[#allocation8] sm:$0xf]
    %v230 = vld [vmem:[#allocation8 + $0x4] sm:$0xf]
    %v231 = vld [vmem:[#allocation8 + $0x8] sm:$0xf]
    %v232 = vld [vmem:[#allocation8 + $0xc] sm:$0xf]
    %v233 = vld [vmem:[#allocation8 + $0x10] sm:$0xf]
    %v234 = vld [vmem:[#allocation8 + $0x14] sm:$0xf]
    %v235 = vld [vmem:[#allocation8 + $0x18] sm:$0xf]
    %v236 = vld [vmem:[#allocation8 + $0x1c] sm:$0xf]
    %v237 = vld [vmem:[#allocation8 + $0x20] sm:$0xf]
    %v238 = vld [vmem:[#allocation8 + $0x24] sm:$0xf]
    %v239 = vld [vmem:[#allocation8 + $0x28] sm:$0xf]
    %v240 = vld [vmem:[#allocation8 + $0x2c] sm:$0xf]
    %v241 = vld [vmem:[#allocation8 + $0x30] sm:$0xf]
    %v242 = vld [vmem:[#allocation8 + $0x34] sm:$0xf]
    %v243 = vld [vmem:[#allocation8 + $0x38] sm:$0xf]
    %v244 = vld [vmem:[#allocation8 + $0x3c] sm:$0xf]
    %v261 = vunpack.c.l.b16 %v229
    %v262 = vunpack.c.l.b16 %v230
    %v263 = vunpack.c.l.b16 %v231
    %v264 = vunpack.c.l.b16 %v232
    %v265 = vunpack.c.l.b16 %v233
    %v266 = vunpack.c.l.b16 %v234
    %v267 = vunpack.c.l.b16 %v235
    %v268 = vunpack.c.l.b16 %v236
    %v269 = vunpack.c.l.b16 %v237
    %v270 = vunpack.c.l.b16 %v238
    %v271 = vunpack.c.l.b16 %v239
    %v272 = vunpack.c.l.b16 %v240
    %v273 = vunpack.c.l.b16 %v241
    %v274 = vunpack.c.l.b16 %v242
    %v275 = vunpack.c.l.b16 %v243
    %v276 = vunpack.c.l.b16 %v244
    %v277 = vpack.c.b16 %v262, %v261
    %v278 = vpack.c.b16 %v264, %v263
    %v279 = vpack.c.b16 %v266, %v265
    %v280 = vpack.c.b16 %v268, %v267
    %v281 = vpack.c.b16 %v270, %v269
    %v282 = vpack.c.b16 %v272, %v271
    %v283 = vpack.c.b16 %v274, %v273
    %v284 = vpack.c.b16 %v276, %v275
    %293 = vmatprep.subr.bf16.mxu0 0
    %294 = vmatpush1.bf16.msra.mxu0 %v284
    %295 = vmatprep.subr.bf16.mxu0 0
    %296 = vmatpush1.bf16.msra.mxu0 %v283
    %297 = vmatprep.subr.bf16.mxu0 0
    %298 = vmatpush1.bf16.msra.mxu0 %v282
    %299 = vmatprep.subr.bf16.mxu0 0
    %300 = vmatpush1.bf16.msra.mxu0 %v281
    %301 = vmatprep.subr.bf16.mxu0 0
    %302 = vmatpush1.bf16.msra.mxu0 %v280
    %303 = vmatprep.subr.bf16.mxu0 0
    %304 = vmatpush1.bf16.msra.mxu0 %v279
    %305 = vmatprep.subr.bf16.mxu0 0
    %306 = vmatpush1.bf16.msra.mxu0 %v278
    %307 = vmatprep.subr.bf16.mxu0 0
    %308 = vmatpush1.bf16.msra.mxu0 %v277
    %309 = vmatprep.subr.bf16.mxu0 0
    %310 = vmatpush2.bf16.msra.mxu0 0
    %311 = vmatprep.subr.bf16.mxu0 0
    %312 = vmatpush2.bf16.msra.mxu0 0
    %313 = vmatprep.subr.bf16.mxu0 0
    %314 = vmatpush2.bf16.msra.mxu0 0
    %315 = vmatprep.subr.bf16.mxu0 0
    %316 = vmatpush2.bf16.msra.mxu0 0
    %317 = vmatprep.subr.bf16.mxu0 0
    %318 = vmatpush2.bf16.msra.mxu0 0
    %319 = vmatprep.subr.bf16.mxu0 0
    %320 = vmatpush2.bf16.msra.mxu0 0
    %321 = vmatprep.subr.bf16.mxu0 0
    %322 = vmatpush2.bf16.msra.mxu0 0
    %323 = vmatprep.subr.bf16.mxu0 0
    %324 = vmatpush2.bf16.msra.mxu0 0
    %325 = vmatprep.mubr.bf16.mxu0 0
    %326 = vmatmul.mubr.bf16.gmra.mxu0 %v228
    %v327 = vpop.f32.mrf.mxu0
    %v328 = vadd.f32 0.0, %v327
    %v329 = vpop.f32.mrf.mxu0
    %v330 = vpop.f32.mrf.mxu0
    %v331 = vadd.f32 0.0, %v330
    %v332 = vpop.f32.mrf.mxu0
    %333 = vdwg.mxu0
    %v334 = vadd.f32 %v226, %v328
    %v335 = vadd.f32 %v227, %v331
    %336 = vst [vmem:[#allocation2] sm:$0xff] %v334
    %337 = vst [vmem:[#allocation2 + $0x8] sm:$0xff] %v335
    // Predicated region
    $region30: #{tpu_custom_call.1} parent=1 // pred_check
      %p338 = pneg %p57
    $region31: #{tpu_custom_call.1} parent=1 // pred_check_branch
      %340 = sbr.rel (%p338) target = $region33
    $region32: #{tpu_custom_call.1} parent=1 // pred_region
      %v341 = vld [vmem:[#allocation2] sm:$0xff]
      %v342 = vld [vmem:[#allocation2 + $0x8] sm:$0xff]
      %v343 = vpack.c.bf16 %v342, %v341
      %v345 = vunpack.c.l.b16 %v343
      %v346 = vunpack.c.h.b16 %v343
      %v347 = vpack.c.b16 %v345, %v345
      %v348 = vpack.c.b16 %v346, %v346
      %351 = vst [vmem:[#allocation9] sm:$0xf] %v347
      %352 = vst [vmem:[#allocation9 + $0x4] sm:$0xf] %v348
    $region33: #{tpu_custom_call.1} parent=1 // pred_fallthru
      _
    // Predicated region
    $region34: #{tpu_custom_call.1} parent=1 // pred_check
      _
    $region35: #{tpu_custom_call.1} parent=1 // pred_check_branch
      %354 = sbr.rel (0) target = $region37
    $region36: #{tpu_custom_call.1} parent=1 // pred_region
      %s356 = ssub.s32 128, 128
      %357 = vsyncadd [#allocation5], %s356
      %s358 = sshll.u32 [#allocation9], 4
      %s359 = int_to_ptr.vmem [resolvable:$true] %s358
      %364 = dma.vmem_to_hbm [thread:$0]  %s359, 128, %s3, [#allocation5], 64, 64, 4
    $region37: #{tpu_custom_call.1} parent=1 // pred_fallthru
      _
    // Predicated region
    $region38: #{tpu_custom_call.1} parent=1 // pred_check
      _
    $region39: #{tpu_custom_call.1} parent=1 // pred_check_branch
      %366 = sbr.rel (0) target = $region41
    $region40: #{tpu_custom_call.1} parent=1 // pred_region
      %367 = dma.done [#allocation5], 128
    $region41: #{tpu_custom_call.1} parent=1 // pred_fallthru
      _
    %368 = vsyncpa [#allocation4], 1
    %369 = vsyncpa [#allocation7], 1
    %370 = vsyncpa [#allocation5], 1

</llo_original>
